<compile_context>
chip_gen: v7x
topology: tpu7x:2x2x1
jax: 0.10.0
libtpu: 0.0.40
codegen_flags: <defaults>
</compile_context>

<pallas_src>
import math

import jax
import jax.numpy as jnp
from jax.experimental import pallas as pl
from jax.experimental.pallas import tpu as pltpu

# ----------------------------- model dims (test case) ------------------------
B = 2            # batch
S = 8            # sequence length
D = 128          # d_model   (lane-aligned)
DF = 256         # d_ff      (lane-aligned)


# ----------------------------- Pallas kernel --------------------------------
def _ffn_kernel(x_ref, w1_ref, b1_ref, w2_ref, b2_ref, o_ref):
    """out = relu(x @ w1 + b1) @ w2 + b2 for one (rows, D) slab.

    x/w1/w2 arrive in bf16 (MXU inputs); accumulation, bias add and ReLU are
    f32 (VPU-safe on v5e); output is stored in f32.
    """
    h = jnp.dot(x_ref[...], w1_ref[...], preferred_element_type=jnp.float32)
    h = jnp.maximum(h + b1_ref[...], 0.0)            # bias + ReLU in f32
    h = h.astype(w2_ref.dtype)                       # bf16 into 2nd MXU pass
    y = jnp.dot(h, w2_ref[...], preferred_element_type=jnp.float32)
    o_ref[...] = (y + b2_ref[...]).astype(o_ref.dtype)


# ----------------------------- wrapper ---------------------------------------
def position_wise_ffn_pallas(x, w1, b1, w2, b2, *,
                             mxu_dtype=jnp.bfloat16, tm=512):
    """x: (..., d_model). Weights are (in_features, out_features); y = x @ W + b."""
    orig_shape = x.shape
    d_model = x.shape[-1]
    d_ff = w1.shape[-1]
    m = math.prod(orig_shape[:-1])        # fold batch*seq into the matmul M dim
    x2d = x.reshape(m, d_model)

    # MXU inputs in bf16 (f32 accumulate); biases stay f32.
    xq = x2d.astype(mxu_dtype)
    w1q = w1.astype(mxu_dtype)
    w2q = w2.astype(mxu_dtype)
    b1r = b1.reshape(1, d_ff).astype(jnp.float32)
    b2r = b2.reshape(1, d_model).astype(jnp.float32)

    itemsize = jnp.dtype(mxu_dtype).itemsize
    cost = pl.CostEstimate(
        flops=2 * m * (d_model * d_ff + d_ff * d_model),
        bytes_accessed=(itemsize * (m * d_model + d_model * d_ff + d_ff * d_model)
                        + 4 * (d_ff + d_model)          # biases (f32)
                        + 4 * m * d_model),             # output (f32)
        transcendentals=0,
    )
    out_shape = jax.ShapeDtypeStruct((m, d_model), jnp.float32)

    if m >= 2 * tm and m % tm == 0:
        # ---- large-M path: stream row tiles, keep weights VMEM-resident ----
        out2d = pl.pallas_call(
            _ffn_kernel,
            out_shape=out_shape,
            grid=(m // tm,),
            in_specs=[
                pl.BlockSpec((tm, d_model), lambda i: (i, 0)),    # x rows stream
                pl.BlockSpec((d_model, d_ff), lambda i: (0, 0)),  # w1 resident
                pl.BlockSpec((1, d_ff), lambda i: (0, 0)),        # b1 resident
                pl.BlockSpec((d_ff, d_model), lambda i: (0, 0)),  # w2 resident
                pl.BlockSpec((1, d_model), lambda i: (0, 0)),     # b2 resident
            ],
            out_specs=pl.BlockSpec((tm, d_model), lambda i: (i, 0)),
            compiler_params=pltpu.CompilerParams(
                dimension_semantics=("parallel",)),   # shards across v7x's 2 TCs
            cost_estimate=cost,
        )(xq, w1q, b1r, w2q, b2r)
    else:
        # ---- small-M path (the test case): no grid, no pipeline machinery --
        vmem = pl.BlockSpec(memory_space=pltpu.MemorySpace.VMEM)
        out2d = pl.pallas_call(
            _ffn_kernel,
            out_shape=out_shape,
            in_specs=[vmem] * 5,
            out_specs=vmem,
            cost_estimate=cost,
        )(xq, w1q, b1r, w2q, b2r)

    return out2d.reshape(orig_shape)


# ----------------------------- references ------------------------------------
def ffn_ref_f32(x, w1, b1, w2, b2):
    h = jnp.maximum(x @ w1 + b1.reshape(1, -1), 0.0)
    return h @ w2 + b2.reshape(1, -1)


def ffn_ref_mirror(x, w1, b1, w2, b2, mxu_dtype=jnp.bfloat16):
    """Same bf16-in / f32-accumulate math as the kernel (tight comparison)."""
    x2d = x.reshape(-1, x.shape[-1]).astype(mxu_dtype)
    h = jnp.dot(x2d, w1.astype(mxu_dtype),
                preferred_element_type=jnp.float32) + b1.reshape(1, -1)
    h = jnp.maximum(h, 0.0).astype(mxu_dtype)
    y = jnp.dot(h, w2.astype(mxu_dtype),
                preferred_element_type=jnp.float32) + b2.reshape(1, -1)
    return y.reshape(x.shape)


# ----------------------------- params (PyTorch nn.Linear init) ---------------
def make_params(key):
    k1, k2 = jax.random.split(key, 2)

    def linear(kw, in_f, out_f):
        # PyTorch nn.Linear: weight (out,in), bias (out,), U(-1/sqrt(in), 1/sqrt(in)).
        # We pass the (in,out) transpose so the kernel computes x @ W + b.
        lim = 1.0 / math.sqrt(in_f)
        w_pt = jax.random.uniform(kw, (out_f, in_f), jnp.float32, -lim, lim)
        b = jax.random.uniform(jax.random.fold_in(kw, 1), (out_f,),
                               jnp.float32, -lim, lim)
        return w_pt.T, b

    w1, b1 = linear(k1, D, DF)
    w2, b2 = linear(k2, DF, D)
    return w1, b1, w2, b2


def _check(out, x, w1, b1, w2, b2):
    assert out.shape == x.shape
    assert bool(jnp.all(jnp.isfinite(out)))
    mirror = ffn_ref_mirror(x, w1, b1, w2, b2)
    assert bool(jnp.allclose(out, mirror, rtol=1e-3, atol=1e-3)), (
        "mirror mismatch", float(jnp.max(jnp.abs(out - mirror))))
    # Deliberately relaxed vs. the f32 reference: bf16 MXU inputs (perf review).
    ref = ffn_ref_f32(x, w1, b1, w2, b2)
    assert bool(jnp.allclose(out, ref, rtol=5e-2, atol=5e-2)), (
        "f32-ref mismatch", float(jnp.max(jnp.abs(out - ref))))


# ----------------------------- main -------------------------------------------
if __name__ == "__main__":
    key = jax.random.PRNGKey(0)
    k_x, k_p, k_x2 = jax.random.split(key, 3)

    w1, b1, w2, b2 = make_params(k_p)

    # Primary test: module-sized shapes (B=2, S=8, d_model=128, d_ff=256)
    # -> small-M path (no grid, whole-array VMEM refs).
    x = jax.random.normal(k_x, (B, S, D), jnp.float32)
    out = jax.block_until_ready(position_wise_ffn_pallas(x, w1, b1, w2, b2))
    _check(out, x, w1, b1, w2, b2)

    # Secondary test: larger batch*seq -> exercises the M-tiled, weight-resident,
    # "parallel" grid path recommended for real workloads.
    x_big = jax.random.normal(k_x2, (B, 512, D), jnp.float32)
    out_big = jax.block_until_ready(
        position_wise_ffn_pallas(x_big, w1, b1, w2, b2))
    _check(out_big, x_big, w1, b1, w2, b2)

    print("KERNEL_OK")
</pallas_src>

<mosaic_0001>
module attributes {stable_mosaic.version = 11 : i64} {
  func.func @_ffn_kernel(%arg0: memref<16x128xbf16, #tpu.memory_space<vmem>>, %arg1: memref<128x256xbf16, #tpu.memory_space<vmem>>, %arg2: memref<1x256xf32, #tpu.memory_space<vmem>>, %arg3: memref<256x128xbf16, #tpu.memory_space<vmem>>, %arg4: memref<1x128xf32, #tpu.memory_space<vmem>>, %arg5: memref<16x128xf32, #tpu.memory_space<vmem>>) attributes {dimension_semantics = [], scalar_prefetch = 0 : i64, scratch_operands = 0 : i64, tpu.core_type = #tpu.core_type<tc>} {
    %c0 = arith.constant 0 : index
    %c0_0 = arith.constant 0 : index
    %0 = vector.load %arg0[%c0, %c0_0] : memref<16x128xbf16, #tpu.memory_space<vmem>>, vector<16x128xbf16>
    %c0_1 = arith.constant 0 : index
    %c0_2 = arith.constant 0 : index
    %1 = vector.load %arg1[%c0_1, %c0_2] : memref<128x256xbf16, #tpu.memory_space<vmem>>, vector<128x256xbf16>
    %cst = arith.constant dense<0.000000e+00> : vector<16x256xf32>
    %2 = tpu.matmul %0, %1, %cst {dimension_numbers = #tpu.dot_dimension_numbers<[1], [0], [0], [1], [0, 0, 1, 1], [], []>} : vector<16x128xbf16>, vector<128x256xbf16>, vector<16x256xf32> -> vector<16x256xf32>
    %c0_3 = arith.constant 0 : index
    %c0_4 = arith.constant 0 : index
    %3 = vector.load %arg2[%c0_3, %c0_4] : memref<1x256xf32, #tpu.memory_space<vmem>>, vector<1x256xf32>
    %4 = vector.broadcast %3 : vector<1x256xf32> to vector<16x256xf32>
    %5 = arith.addf %2, %4 : vector<16x256xf32>
    %cst_5 = arith.constant 0.000000e+00 : f32
    %6 = vector.broadcast %cst_5 : f32 to vector<16x256xf32>
    %7 = arith.maximumf %5, %6 : vector<16x256xf32>
    %8 = arith.truncf %7 : vector<16x256xf32> to vector<16x256xbf16>
    %c0_6 = arith.constant 0 : index
    %c0_7 = arith.constant 0 : index
    %9 = vector.load %arg3[%c0_6, %c0_7] : memref<256x128xbf16, #tpu.memory_space<vmem>>, vector<256x128xbf16>
    %cst_8 = arith.constant dense<0.000000e+00> : vector<16x128xf32>
    %10 = tpu.matmul %8, %9, %cst_8 {dimension_numbers = #tpu.dot_dimension_numbers<[1], [0], [0], [1], [0, 0, 1, 1], [], []>} : vector<16x256xbf16>, vector<256x128xbf16>, vector<16x128xf32> -> vector<16x128xf32>
    %c0_9 = arith.constant 0 : index
    %c0_10 = arith.constant 0 : index
    %11 = vector.load %arg4[%c0_9, %c0_10] : memref<1x128xf32, #tpu.memory_space<vmem>>, vector<1x128xf32>
    %12 = vector.broadcast %11 : vector<1x128xf32> to vector<16x128xf32>
    %13 = arith.addf %10, %12 : vector<16x128xf32>
    %c0_11 = arith.constant 0 : index
    %c0_12 = arith.constant 0 : index
    %14 = vector.load %arg5[%c0_11, %c0_12] : memref<16x128xf32, #tpu.memory_space<vmem>>, vector<16x128xf32>
    tpu.vector_store %arg5[%c0_11, %c0_12], %13 {strides = array<i32>} : memref<16x128xf32, #tpu.memory_space<vmem>>, vector<16x128xf32>,
    return
  }
}

</mosaic_0001>

<llo_original>
// kernel: tpu_custom_call.1
$region0: #{tpu_custom_call.1}
  #allocation0 [shape = 'u32[]', space=smem, size = 0x4, offset = 0x4, fixed_abs, tag = 'smem constant byte address 0x4 - core index']
  #allocation1 [shape = 'u32[144,128]{1,0:T(1,128)}', space=vmem, size = 0x12000, scoped, tag = 'internal scratch']
  %s0 = inlined_call_operand.hbm [shape: bf16[16,128], index: 0, kind: input, shape index: {}]
  %s1 = inlined_call_operand.hbm [shape: bf16[128,256], index: 1, kind: input, shape index: {}]
  %s2 = inlined_call_operand.vmem [shape: f32[1,256], index: 2, kind: input, shape index: {}]
  %s3 = inlined_call_operand.hbm [shape: bf16[256,128], index: 3, kind: input, shape index: {}]
  %s4 = inlined_call_operand.vmem [shape: f32[1,128], index: 4, kind: input, shape index: {}]
  %s5 = inlined_call_operand.hbm [shape: f32[16,128], index: 5, kind: output, shape index: {}]
  %s6 = sld [smem:[#allocation0]]
  $region42: #{tpu_custom_call.1} parent=0
    _
  %s8 = ssub.s32 1, %s6
  %s9 = scalar_select 0, %s8, %s6
  $region1: #{tpu_custom_call.1} parent=0
    #allocation2 [shape = 'u8[4096]{0}', space=vmem, size = 0x1000, scoped, tag = 'input window, operand 0, single buffered']
    #allocation3 [shape = 's32[1]{0}', space=sflag, size = 0x4, scoped, tag = 'scoped memory for tpu_custom_call.1']
    #allocation4 [shape = 's32[1]{0}', space=sflag, size = 0x4, scoped, tag = 'scoped memory for tpu_custom_call.1']
    #allocation5 [shape = 'u8[65536]{0}', space=vmem, size = 0x10000, scoped, tag = 'input window, operand 1, single buffered']
    #allocation6 [shape = 's32[1]{0}', space=sflag, size = 0x4, scoped, tag = 'scoped memory for tpu_custom_call.1']
    #allocation7 [shape = 'u8[65536]{0}', space=vmem, size = 0x10000, scoped, tag = 'input window, operand 3, single buffered']
    #allocation8 [shape = 'u8[8192]{0}', space=vmem, size = 0x2000, scoped, tag = 'output window, operand 0, single buffered']
    %10 = vsyncpa [#allocation3], 0
    %11 = vsyncpa [#allocation6], 0
    %12 = vsyncpa [#allocation4], 0
    // Predicated region
    $region2: #{tpu_custom_call.1} parent=1 // pred_check
      _
    $region3: #{tpu_custom_call.1} parent=1 // pred_check_branch
      %14 = sbr.rel (0) target = $region5
    $region4: #{tpu_custom_call.1} parent=1 // pred_region
      %s16 = ssub.s32 128, 128
      %17 = vsyncadd [#allocation3], %s16
      %s18 = sshll.u32 [#allocation2], 4
      %s19 = int_to_ptr.vmem [resolvable:$true] %s18
      %24 = dma.hbm_to_vmem [thread:$0]  %s0, 128, %s19, [#allocation3], 64, 64, 4
    $region5: #{tpu_custom_call.1} parent=1 // pred_fallthru
      _
    // Predicated region
    $region6: #{tpu_custom_call.1} parent=1 // pred_check
      _
    $region7: #{tpu_custom_call.1} parent=1 // pred_check_branch
      %26 = sbr.rel (0) target = $region9
    $region8: #{tpu_custom_call.1} parent=1 // pred_region
      %s28 = ssub.s32 2048, 2048
      %29 = vsyncadd [#allocation6], %s28
      %s30 = sshll.u32 [#allocation5], 4
      %s31 = int_to_ptr.vmem [resolvable:$true] %s30
      %36 = dma.hbm_to_vmem [thread:$0]  %s1, 2048, %s31, [#allocation6], 128, 128, 8
    $region9: #{tpu_custom_call.1} parent=1 // pred_fallthru
      _
    // Predicated region
    $region10: #{tpu_custom_call.1} parent=1 // pred_check
      _
    $region11: #{tpu_custom_call.1} parent=1 // pred_check_branch
      %38 = sbr.rel (0) target = $region13
    $region12: #{tpu_custom_call.1} parent=1 // pred_region
      _
    $region13: #{tpu_custom_call.1} parent=1 // pred_fallthru
      _
    // Predicated region
    $region14: #{tpu_custom_call.1} parent=1 // pred_check
      _
    $region15: #{tpu_custom_call.1} parent=1 // pred_check_branch
      %40 = sbr.rel (0) target = $region17
    $region16: #{tpu_custom_call.1} parent=1 // pred_region
      %s42 = ssub.s32 2048, 2048
      %43 = vsyncadd [#allocation6], %s42
      %s44 = sshll.u32 [#allocation7], 4
      %s45 = int_to_ptr.vmem [resolvable:$true] %s44
      %50 = dma.hbm_to_vmem [thread:$0]  %s3, 2048, %s45, [#allocation6], 64, 64, 4
    $region17: #{tpu_custom_call.1} parent=1 // pred_fallthru
      _
    // Predicated region
    $region18: #{tpu_custom_call.1} parent=1 // pred_check
      _
    $region19: #{tpu_custom_call.1} parent=1 // pred_check_branch
      %52 = sbr.rel (0) target = $region21
    $region20: #{tpu_custom_call.1} parent=1 // pred_region
      _
    $region21: #{tpu_custom_call.1} parent=1 // pred_fallthru
      _
    // Predicated region
    $region22: #{tpu_custom_call.1} parent=1 // pred_check
      _
    $region23: #{tpu_custom_call.1} parent=1 // pred_check_branch
      %54 = sbr.rel (0) target = $region25
    $region24: #{tpu_custom_call.1} parent=1 // pred_region
      %55 = dma.done [#allocation3], 128
    $region25: #{tpu_custom_call.1} parent=1 // pred_fallthru
      _
    // Predicated region
    $region26: #{tpu_custom_call.1} parent=1 // pred_check
      _
    $region27: #{tpu_custom_call.1} parent=1 // pred_check_branch
      %57 = sbr.rel (0) target = $region29
    $region28: #{tpu_custom_call.1} parent=1 // pred_region
      %58 = dma.done [#allocation6], 2048
    $region29: #{tpu_custom_call.1} parent=1 // pred_fallthru
      _
    // Predicated region
    $region30: #{tpu_custom_call.1} parent=1 // pred_check
      _
    $region31: #{tpu_custom_call.1} parent=1 // pred_check_branch
      %60 = sbr.rel (0) target = $region33
    $region32: #{tpu_custom_call.1} parent=1 // pred_region
      %61 = dma.done [#allocation6], 2048
    $region33: #{tpu_custom_call.1} parent=1 // pred_fallthru
      _
    %v63 = vld [vmem:[#allocation2] sm:$0xf]
    %v64 = vld [vmem:[#allocation2 + $0x4] sm:$0xf]
    %v65 = vld [vmem:[#allocation5] sm:$0xff]
    %v66 = vld [vmem:[#allocation5 + $0x8] sm:$0xff]
    %v67 = vld [vmem:[#allocation5 + $0x10] sm:$0xff]
    %v68 = vld [vmem:[#allocation5 + $0x18] sm:$0xff]
    %v69 = vld [vmem:[#allocation5 + $0x20] sm:$0xff]
    %v70 = vld [vmem:[#allocation5 + $0x28] sm:$0xff]
    %v71 = vld [vmem:[#allocation5 + $0x30] sm:$0xff]
    %v72 = vld [vmem:[#allocation5 + $0x38] sm:$0xff]
    %v73 = vld [vmem:[#allocation5 + $0x40] sm:$0xff]
    %v74 = vld [vmem:[#allocation5 + $0x48] sm:$0xff]
    %v75 = vld [vmem:[#allocation5 + $0x50] sm:$0xff]
    %v76 = vld [vmem:[#allocation5 + $0x58] sm:$0xff]
    %v77 = vld [vmem:[#allocation5 + $0x60] sm:$0xff]
    %v78 = vld [vmem:[#allocation5 + $0x68] sm:$0xff]
    %v79 = vld [vmem:[#allocation5 + $0x70] sm:$0xff]
    %v80 = vld [vmem:[#allocation5 + $0x78] sm:$0xff]
    %v81 = vld [vmem:[%s2] sm:$0x3]
    %v83 = vlaneseq
    %v84 = vshrl.u32 %v83, 7
    %v85 = vsub.s32 0, %v84
    %v86 = vrot.slane %v81, %v85
    %v87 = vlaneseq
    %v88 = vshrl.u32 %v87, 7
    %v89 = vsub.s32 1, %v88
    %v90 = vrot.slane %v81, %v89
    %v95 = vunpack.c.l.b16 %v63
    %v96 = vunpack.c.l.b16 %v64
    %v97 = vpack.c.b16 %v96, %v95
    %v115 = vunpack.c.l.b16 %v65
    %v116 = vunpack.c.h.b16 %v65
    %v117 = vunpack.c.l.b16 %v66
    %v118 = vunpack.c.h.b16 %v66
    %v119 = vunpack.c.l.b16 %v67
    %v120 = vunpack.c.h.b16 %v67
    %v121 = vunpack.c.l.b16 %v68
    %v122 = vunpack.c.h.b16 %v68
    %v123 = vunpack.c.l.b16 %v69
    %v124 = vunpack.c.h.b16 %v69
    %v125 = vunpack.c.l.b16 %v70
    %v126 = vunpack.c.h.b16 %v70
    %v127 = vunpack.c.l.b16 %v71
    %v128 = vunpack.c.h.b16 %v71
    %v129 = vunpack.c.l.b16 %v72
    %v130 = vunpack.c.h.b16 %v72
    %v131 = vunpack.c.l.b16 %v73
    %v132 = vunpack.c.h.b16 %v73
    %v133 = vunpack.c.l.b16 %v74
    %v134 = vunpack.c.h.b16 %v74
    %v135 = vunpack.c.l.b16 %v75
    %v136 = vunpack.c.h.b16 %v75
    %v137 = vunpack.c.l.b16 %v76
    %v138 = vunpack.c.h.b16 %v76
    %v139 = vunpack.c.l.b16 %v77
    %v140 = vunpack.c.h.b16 %v77
    %v141 = vunpack.c.l.b16 %v78
    %v142 = vunpack.c.h.b16 %v78
    %v143 = vunpack.c.l.b16 %v79
    %v144 = vunpack.c.h.b16 %v79
    %v145 = vunpack.c.l.b16 %v80
    %v146 = vunpack.c.h.b16 %v80
    %v147 = vpack.c.b16 %v117, %v115
    %v148 = vpack.c.b16 %v118, %v116
    %v149 = vpack.c.b16 %v121, %v119
    %v150 = vpack.c.b16 %v122, %v120
    %v151 = vpack.c.b16 %v125, %v123
    %v152 = vpack.c.b16 %v126, %v124
    %v153 = vpack.c.b16 %v129, %v127
    %v154 = vpack.c.b16 %v130, %v128
    %v155 = vpack.c.b16 %v133, %v131
    %v156 = vpack.c.b16 %v134, %v132
    %v157 = vpack.c.b16 %v137, %v135
    %v158 = vpack.c.b16 %v138, %v136
    %v159 = vpack.c.b16 %v141, %v139
    %v160 = vpack.c.b16 %v142, %v140
    %v161 = vpack.c.b16 %v145, %v143
    %v162 = vpack.c.b16 %v146, %v144
    %179 = vmatprep.subr.bf16.mxu0 %v148
    %180 = vmatpush1.bf16.msra.mxu0 %v147
    %181 = vmatprep.subr.bf16.mxu0 %v150
    %182 = vmatpush1.bf16.msra.mxu0 %v149
    %183 = vmatprep.subr.bf16.mxu0 %v152
    %184 = vmatpush1.bf16.msra.mxu0 %v151
    %185 = vmatprep.subr.bf16.mxu0 %v154
    %186 = vmatpush1.bf16.msra.mxu0 %v153
    %187 = vmatprep.subr.bf16.mxu0 %v156
    %188 = vmatpush1.bf16.msra.mxu0 %v155
    %189 = vmatprep.subr.bf16.mxu0 %v158
    %190 = vmatpush1.bf16.msra.mxu0 %v157
    %191 = vmatprep.subr.bf16.mxu0 %v160
    %192 = vmatpush1.bf16.msra.mxu0 %v159
    %193 = vmatprep.subr.bf16.mxu0 %v162
    %194 = vmatpush1.bf16.msra.mxu0 %v161
    %195 = vmatprep.subr.bf16.mxu0 0
    %196 = vmatpush1.bf16.msra.mxu0 0
    %197 = vmatprep.subr.bf16.mxu0 0
    %198 = vmatpush1.bf16.msra.mxu0 0
    %199 = vmatprep.subr.bf16.mxu0 0
    %200 = vmatpush1.bf16.msra.mxu0 0
    %201 = vmatprep.subr.bf16.mxu0 0
    %202 = vmatpush1.bf16.msra.mxu0 0
    %203 = vmatprep.subr.bf16.mxu0 0
    %204 = vmatpush1.bf16.msra.mxu0 0
    %205 = vmatprep.subr.bf16.mxu0 0
    %206 = vmatpush1.bf16.msra.mxu0 0
    %207 = vmatprep.subr.bf16.mxu0 0
    %208 = vmatpush1.bf16.msra.mxu0 0
    %209 = vmatprep.subr.bf16.mxu0 0
    %210 = vmatpush1.bf16.msra.mxu0 0
    %211 = vmatprep.mubr.bf16.mxu0 0
    %212 = vmatmul.mubr.bf16.gmra.mrb[0].mxu0 %v97
    %v213 = vpop.f32.mrb[0].mxu0
    %v214 = vadd.f32 %v86, %v213
    %v215 = vpop.f32.mrb[0].mxu0
    %v216 = vadd.f32 %v90, %v215
    %v217 = vpop.f32.mrb[0].mxu0
    %v218 = vadd.f32 %v86, %v217
    %v219 = vpop.f32.mrb[0].mxu0
    %v220 = vadd.f32 %v90, %v219
    %221 = vdwg.mxu0
    %v222 = vmax.f32 %v214, 0.0
    %v223 = vmax.f32 %v216, 0.0
    %v224 = vmax.f32 %v218, 0.0
    %v225 = vmax.f32 %v220, 0.0
    %v226 = vpack.c.bf16 %v224, %v222
    %v227 = vpack.c.bf16 %v225, %v223
    %v228 = vld [vmem:[#allocation7] sm:$0xf]
    %v229 = vld [vmem:[#allocation7 + $0x4] sm:$0xf]
    %v230 = vld [vmem:[#allocation7 + $0x8] sm:$0xf]
    %v231 = vld [vmem:[#allocation7 + $0xc] sm:$0xf]
    %v232 = vld [vmem:[#allocation7 + $0x10] sm:$0xf]
    %v233 = vld [vmem:[#allocation7 + $0x14] sm:$0xf]
    %v234 = vld [vmem:[#allocation7 + $0x18] sm:$0xf]
    %v235 = vld [vmem:[#allocation7 + $0x1c] sm:$0xf]
    %v236 = vld [vmem:[#allocation7 + $0x20] sm:$0xf]
    %v237 = vld [vmem:[#allocation7 + $0x24] sm:$0xf]
    %v238 = vld [vmem:[#allocation7 + $0x28] sm:$0xf]
    %v239 = vld [vmem:[#allocation7 + $0x2c] sm:$0xf]
    %v240 = vld [vmem:[#allocation7 + $0x30] sm:$0xf]
    %v241 = vld [vmem:[#allocation7 + $0x34] sm:$0xf]
    %v242 = vld [vmem:[#allocation7 + $0x38] sm:$0xf]
    %v243 = vld [vmem:[#allocation7 + $0x3c] sm:$0xf]
    %v244 = vld [vmem:[#allocation7 + $0x40] sm:$0xf]
    %v245 = vld [vmem:[#allocation7 + $0x44] sm:$0xf]
    %v246 = vld [vmem:[#allocation7 + $0x48] sm:$0xf]
    %v247 = vld [vmem:[#allocation7 + $0x4c] sm:$0xf]
    %v248 = vld [vmem:[#allocation7 + $0x50] sm:$0xf]
    %v249 = vld [vmem:[#allocation7 + $0x54] sm:$0xf]
    %v250 = vld [vmem:[#allocation7 + $0x58] sm:$0xf]
    %v251 = vld [vmem:[#allocation7 + $0x5c] sm:$0xf]
    %v252 = vld [vmem:[#allocation7 + $0x60] sm:$0xf]
    %v253 = vld [vmem:[#allocation7 + $0x64] sm:$0xf]
    %v254 = vld [vmem:[#allocation7 + $0x68] sm:$0xf]
    %v255 = vld [vmem:[#allocation7 + $0x6c] sm:$0xf]
    %v256 = vld [vmem:[#allocation7 + $0x70] sm:$0xf]
    %v257 = vld [vmem:[#allocation7 + $0x74] sm:$0xf]
    %v258 = vld [vmem:[#allocation7 + $0x78] sm:$0xf]
    %v259 = vld [vmem:[#allocation7 + $0x7c] sm:$0xf]
    %v260 = vld [vmem:[%s4] sm:$0x1]
    %v262 = vlaneseq
    %v263 = vshrl.u32 %v262, 7
    %v264 = vsub.s32 0, %v263
    %v265 = vrot.slane %v260, %v264
    %v299 = vunpack.c.l.b16 %v228
    %v300 = vunpack.c.l.b16 %v229
    %v301 = vunpack.c.l.b16 %v230
    %v302 = vunpack.c.l.b16 %v231
    %v303 = vunpack.c.l.b16 %v232
    %v304 = vunpack.c.l.b16 %v233
    %v305 = vunpack.c.l.b16 %v234
    %v306 = vunpack.c.l.b16 %v235
    %v307 = vunpack.c.l.b16 %v236
    %v308 = vunpack.c.l.b16 %v237
    %v309 = vunpack.c.l.b16 %v238
    %v310 = vunpack.c.l.b16 %v239
    %v311 = vunpack.c.l.b16 %v240
    %v312 = vunpack.c.l.b16 %v241
    %v313 = vunpack.c.l.b16 %v242
    %v314 = vunpack.c.l.b16 %v243
    %v315 = vunpack.c.l.b16 %v244
    %v316 = vunpack.c.l.b16 %v245
    %v317 = vunpack.c.l.b16 %v246
    %v318 = vunpack.c.l.b16 %v247
    %v319 = vunpack.c.l.b16 %v248
    %v320 = vunpack.c.l.b16 %v249
    %v321 = vunpack.c.l.b16 %v250
    %v322 = vunpack.c.l.b16 %v251
    %v323 = vunpack.c.l.b16 %v252
    %v324 = vunpack.c.l.b16 %v253
    %v325 = vunpack.c.l.b16 %v254
    %v326 = vunpack.c.l.b16 %v255
    %v327 = vunpack.c.l.b16 %v256
    %v328 = vunpack.c.l.b16 %v257
    %v329 = vunpack.c.l.b16 %v258
    %v330 = vunpack.c.l.b16 %v259
    %v331 = vpack.c.b16 %v300, %v299
    %v332 = vpack.c.b16 %v302, %v301
    %v333 = vpack.c.b16 %v304, %v303
    %v334 = vpack.c.b16 %v306, %v305
    %v335 = vpack.c.b16 %v308, %v307
    %v336 = vpack.c.b16 %v310, %v309
    %v337 = vpack.c.b16 %v312, %v311
    %v338 = vpack.c.b16 %v314, %v313
    %v339 = vpack.c.b16 %v316, %v315
    %v340 = vpack.c.b16 %v318, %v317
    %v341 = vpack.c.b16 %v320, %v319
    %v342 = vpack.c.b16 %v322, %v321
    %v343 = vpack.c.b16 %v324, %v323
    %v344 = vpack.c.b16 %v326, %v325
    %v345 = vpack.c.b16 %v328, %v327
    %v346 = vpack.c.b16 %v330, %v329
    %363 = vmatprep.subr.bf16.mxu0 0
    %364 = vmatpush1.bf16.msra.mxu0 %v331
    %365 = vmatprep.subr.bf16.mxu0 0
    %366 = vmatpush1.bf16.msra.mxu0 %v332
    %367 = vmatprep.subr.bf16.mxu0 0
    %368 = vmatpush1.bf16.msra.mxu0 %v333
    %369 = vmatprep.subr.bf16.mxu0 0
    %370 = vmatpush1.bf16.msra.mxu0 %v334
    %371 = vmatprep.subr.bf16.mxu0 0
    %372 = vmatpush1.bf16.msra.mxu0 %v335
    %373 = vmatprep.subr.bf16.mxu0 0
    %374 = vmatpush1.bf16.msra.mxu0 %v336
    %375 = vmatprep.subr.bf16.mxu0 0
    %376 = vmatpush1.bf16.msra.mxu0 %v337
    %377 = vmatprep.subr.bf16.mxu0 0
    %378 = vmatpush1.bf16.msra.mxu0 %v338
    %379 = vmatprep.subr.bf16.mxu0 0
    %380 = vmatpush1.bf16.msra.mxu0 %v339
    %381 = vmatprep.subr.bf16.mxu0 0
    %382 = vmatpush1.bf16.msra.mxu0 %v340
    %383 = vmatprep.subr.bf16.mxu0 0
    %384 = vmatpush1.bf16.msra.mxu0 %v341
    %385 = vmatprep.subr.bf16.mxu0 0
    %386 = vmatpush1.bf16.msra.mxu0 %v342
    %387 = vmatprep.subr.bf16.mxu0 0
    %388 = vmatpush1.bf16.msra.mxu0 %v343
    %389 = vmatprep.subr.bf16.mxu0 0
    %390 = vmatpush1.bf16.msra.mxu0 %v344
    %391 = vmatprep.subr.bf16.mxu0 0
    %392 = vmatpush1.bf16.msra.mxu0 %v345
    %393 = vmatprep.subr.bf16.mxu0 0
    %394 = vmatpush1.bf16.msra.mxu0 %v346
    %395 = vmatprep.mubr.bf16.mxu0 %v227
    %396 = vmatmul.mubr.bf16.gmra.mrb[0].mxu0 %v226
    %v397 = vpop.f32.mrb[0].mxu0
    %v398 = vadd.f32 %v265, %v397
    %v399 = vpop.f32.mrb[0].mxu0
    %v400 = vpop.f32.mrb[0].mxu0
    %v401 = vadd.f32 %v265, %v400
    %v402 = vpop.f32.mrb[0].mxu0
    %403 = vdwg.mxu0
    %404 = vst [vmem:[#allocation8] sm:$0xff] %v398
    %405 = vst [vmem:[#allocation8 + $0x8] sm:$0xff] %v401
    // Predicated region
    $region34: #{tpu_custom_call.1} parent=1 // pred_check
      _
    $region35: #{tpu_custom_call.1} parent=1 // pred_check_branch
      %407 = sbr.rel (0) target = $region37
    $region36: #{tpu_custom_call.1} parent=1 // pred_region
      %s409 = ssub.s32 256, 256
      %410 = vsyncadd [#allocation4], %s409
      %s411 = sshll.u32 [#allocation8], 4
      %s412 = int_to_ptr.vmem [resolvable:$true] %s411
      %417 = dma.vmem_to_hbm [thread:$0]  %s412, 256, %s5, [#allocation4], 128, 128, 8
    $region37: #{tpu_custom_call.1} parent=1 // pred_fallthru
      _
    // Predicated region
    $region38: #{tpu_custom_call.1} parent=1 // pred_check
      _
    $region39: #{tpu_custom_call.1} parent=1 // pred_check_branch
      %419 = sbr.rel (0) target = $region41
    $region40: #{tpu_custom_call.1} parent=1 // pred_region
      %420 = dma.done [#allocation4], 256
    $region41: #{tpu_custom_call.1} parent=1 // pred_fallthru
      _
    %421 = vsyncpa [#allocation3], 1
    %422 = vsyncpa [#allocation6], 1
    %423 = vsyncpa [#allocation4], 1

</llo_original>
